<compile_context>
chip_gen: v7x
topology: tpu7x:2x2x1
jax: 0.10.0
libtpu: 0.0.40
codegen_flags: <defaults>
</compile_context>

<pallas_src>
import functools

import jax
import jax.numpy as jnp
import numpy as np
from jax.experimental import pallas as pl

# ---------------- config (small synthetic shapes) ----------------
BATCH = 2
SEQ = 8
HIDDEN = 32          # transformer hidden_size
VOCAB = 50
N_FILTERS = 8
FILTER_SIZES = (2, 3, 4)
CLASS_NUM = 4

KMAX = max(FILTER_SIZES)
D_IN = N_FILTERS * len(FILTER_SIZES)   # 24 pooled features
FPAD = 128                             # lane-dense padded filter/class dim
KDIM = KMAX * HIDDEN                   # 128: exactly one MXU contraction tile

assert SEQ >= KMAX, "sequence must be at least as long as the largest filter"
assert KDIM == 128, "im2col contraction dim must match one MXU tile"


# ---------------- fused Pallas kernel (single invocation, whole batch) -------
def _textcnn_fused_kernel(x_ref, w_ref, bt_ref, fcw_ref, fcb_ref,
                          out_ref, emb_ref, *, batch, seq):
    """conv(k=2,3,4) + ReLU + max-pool + concat + fc for the whole batch.

    x_ref:   (B*S, 128)  bf16  pre-packed im2col of masked encoder output
    w_ref:   (128, 128)  bf16  packed conv weights (3 banks, zero padded)
    bt_ref:  (S, 128)    f32   conv bias + (-1e30 at invalid (t, lane))
    fcw_ref: (128, 128)  bf16  zero-padded fc weight
    fcb_ref: (1, 128)    f32   zero-padded fc bias
    out_ref: (B, 128)    f32   padded logits
    emb_ref: (B, 128)    f32   padded pooled features (out_embedding)
    """
    # All three conv banks for every (batch, time) row in one MXU matmul.
    conv = jnp.dot(x_ref[...], w_ref[...],
                   preferred_element_type=jnp.float32)          # (B*S, 128) f32
    conv = conv.reshape(batch, seq, FPAD)
    # bias + time-validity table (broadcast over batch), then ReLU.  Invalid
    # positions become 0, which cannot exceed the valid max (ReLU >= 0).
    conv = jnp.maximum(conv + bt_ref[...], 0.0)
    pooled = jnp.max(conv, axis=1)                               # (B, 128) f32
    # Batched FC: one (B, 128) @ (128, 128) matmul for all rows.
    logits = jnp.dot(pooled.astype(fcw_ref.dtype), fcw_ref[...],
                     preferred_element_type=jnp.float32) + fcb_ref[...]
    out_ref[...] = logits
    emb_ref[...] = pooled


def textcnn_fused(x_im2col, packed):
    """x_im2col: (B*S, 128) bf16 -> padded (B, 128) logits and pooled features."""
    bs = x_im2col.shape[0]
    batch = bs // SEQ
    kernel = functools.partial(_textcnn_fused_kernel, batch=batch, seq=SEQ)
    # No grid: one invocation covers the whole (tiny) batch; all operands are
    # whole-array VMEM blocks (default specs), so constants are loaded once
    # and there is no per-step pipelining overhead.
    out_pad, emb_pad = pl.pallas_call(
        kernel,
        out_shape=(
            jax.ShapeDtypeStruct((batch, FPAD), jnp.float32),
            jax.ShapeDtypeStruct((batch, FPAD), jnp.float32),
        ),
    )(x_im2col, packed["conv_w"], packed["bias_tmask"],
      packed["fc_w"], packed["fc_b"])
    return out_pad, emb_pad


# ---------------- parameter init (deterministic) + packing ----------------
def init_params(key):
    keys = jax.random.split(key, 1 + 2 * len(FILTER_SIZES) + 2)
    params = {}
    params["embedding"] = (jax.random.normal(keys[0], (VOCAB, HIDDEN),
                                             jnp.float32) * 0.02)
    for i, k in enumerate(FILTER_SIZES):
        # PyTorch Conv2d(1, F, (k, H)) weight is (F, 1, k, H); stored as (k, H, F)
        params[f"conv{k}_w"] = (jax.random.normal(keys[1 + 2 * i],
                                                  (k, HIDDEN, N_FILTERS),
                                                  jnp.float32) * 0.1)
        params[f"conv{k}_b"] = (jax.random.normal(keys[2 + 2 * i],
                                                  (1, N_FILTERS),
                                                  jnp.float32) * 0.05)
    # PyTorch Linear(d_in, C) weight is (C, d_in); stored here as (d_in, C)
    params["fc_w"] = (jax.random.normal(keys[-2], (D_IN, CLASS_NUM),
                                        jnp.float32) * 0.1)
    params["fc_b"] = (jax.random.normal(keys[-1], (1, CLASS_NUM),
                                        jnp.float32) * 0.05)
    return params


def pack_params(params):
    """Pack conv/fc weights into lane-dense, zero-padded MXU-friendly slabs."""
    w_packed = jnp.zeros((KDIM, FPAD), jnp.float32)
    # bias_tmask[t, lane] = conv_b[lane] + (-1e30 if t invalid for lane's bank)
    bias_tmask = jnp.zeros((SEQ, FPAD), jnp.float32)
    t = jnp.arange(SEQ)
    for i, k in enumerate(FILTER_SIZES):
        lo, hi = i * N_FILTERS, (i + 1) * N_FILTERS
        w_packed = w_packed.at[:k * HIDDEN, lo:hi].set(
            params[f"conv{k}_w"].reshape(k * HIDDEN, N_FILTERS))
        col = jnp.where(t > SEQ - k, -1e30, 0.0).astype(jnp.float32)[:, None]
        bias_tmask = bias_tmask.at[:, lo:hi].set(col + params[f"conv{k}_b"])
    fc_w = jnp.zeros((FPAD, FPAD), jnp.float32)
    fc_w = fc_w.at[:D_IN, :CLASS_NUM].set(params["fc_w"])
    fc_b = jnp.zeros((1, FPAD), jnp.float32).at[:, :CLASS_NUM].set(params["fc_b"])

    # Invariant: padded fc rows/cols must stay exactly zero so padded pooled
    # lanes are inert in the logits (relied on by the -1e30 time mask scheme).
    assert np.all(np.asarray(fc_w)[D_IN:, :] == 0.0)
    assert np.all(np.asarray(fc_w)[:, CLASS_NUM:] == 0.0)

    return {
        "embedding": params["embedding"],
        "conv_w": w_packed.astype(jnp.bfloat16),
        "bias_tmask": bias_tmask,
        "fc_w": fc_w.astype(jnp.bfloat16),
        "fc_b": fc_b,
    }


# ---------------- forward ----------------
def _im2col(enc):
    """(B, S, H) -> (B*S, KMAX*H): row (b, t) = [enc[b,t], ..., enc[b,t+KMAX-1]]."""
    b, s, h = enc.shape
    encp = jnp.pad(enc, ((0, 0), (0, KMAX - 1), (0, 0)))
    cols = jnp.concatenate([encp[:, j:j + s, :] for j in range(KMAX)], axis=-1)
    return cols.reshape(b * s, KMAX * h)


def forward(packed, input_ids, attention_masks, text_lengths):
    """Mirrors TransformersCNN.forward (eval mode): returns (logits, out_embedding)."""
    del text_lengths  # not used by the reference forward either
    # TODO(synk): the HuggingFace transformer encoder has no clean Pallas
    # equivalent; a deterministic embedding-lookup + mask stub stands in for it.
    enc = jnp.take(packed["embedding"], input_ids, axis=0)          # (B, S, H) f32
    enc = enc * attention_masks[..., None].astype(jnp.float32)
    # Lane-dense im2col pre-pack in XLA: kernel sees a single bf16 (B*S, 128) slab.
    x = _im2col(enc).astype(jnp.bfloat16)
    out_pad, emb_pad = textcnn_fused(x, packed)
    out = out_pad[:, :CLASS_NUM]          # strip lane padding
    out_embedding = emb_pad[:, :D_IN]
    return out, out_embedding


# ---------------- pure-JAX reference (f32) ----------------
def reference_forward(params, input_ids, attention_masks):
    enc = jnp.take(params["embedding"], input_ids, axis=0)
    enc = enc * attention_masks[..., None].astype(jnp.float32)
    pooled = []
    for k in FILTER_SIZES:
        w, b = params[f"conv{k}_w"], params[f"conv{k}_b"]
        T = SEQ - k + 1
        acc = jnp.zeros((enc.shape[0], T, N_FILTERS), jnp.float32)
        for j in range(k):
            acc = acc + jnp.einsum("bth,hf->btf", enc[:, j:j + T, :], w[j])
        acc = jnp.maximum(acc + b, 0.0)
        pooled.append(jnp.max(acc, axis=1))
    emb = jnp.concatenate(pooled, axis=1)
    out = emb @ params["fc_w"] + params["fc_b"]
    return out, emb


if __name__ == "__main__":
    key = jax.random.PRNGKey(0)
    pkey, ikey = jax.random.split(key)
    params = init_params(pkey)
    packed = pack_params(params)

    input_ids = jax.random.randint(ikey, (BATCH, SEQ), 0, VOCAB, dtype=jnp.int32)
    attention_masks = jnp.ones((BATCH, SEQ), dtype=jnp.int32)
    text_lengths = jnp.full((BATCH,), SEQ, dtype=jnp.int32)  # unused in forward

    fwd = jax.jit(forward)
    out, out_embedding = fwd(packed, input_ids, attention_masks, text_lengths)
    jax.block_until_ready((out, out_embedding))

    assert out.shape == (BATCH, CLASS_NUM)
    assert out_embedding.shape == (BATCH, D_IN)

    ref_out, ref_emb = reference_forward(params, input_ids, attention_masks)
    np.testing.assert_allclose(np.asarray(out), np.asarray(ref_out),
                               rtol=2e-2, atol=1e-2)
    np.testing.assert_allclose(np.asarray(out_embedding), np.asarray(ref_emb),
                               rtol=2e-2, atol=1e-2)
    print("KERNEL_OK")
</pallas_src>

<mosaic_0001>
module attributes {stable_mosaic.version = 11 : i64} {
  func.func @_textcnn_fused_kernel(%arg0: memref<16x128xbf16, #tpu.memory_space<vmem>>, %arg1: memref<128x128xbf16, #tpu.memory_space<vmem>>, %arg2: memref<8x128xf32, #tpu.memory_space<vmem>>, %arg3: memref<128x128xbf16, #tpu.memory_space<vmem>>, %arg4: memref<1x128xf32, #tpu.memory_space<vmem>>, %arg5: memref<2x128xf32, #tpu.memory_space<vmem>>, %arg6: memref<2x128xf32, #tpu.memory_space<vmem>>) attributes {dimension_semantics = [], scalar_prefetch = 0 : i64, scratch_operands = 0 : i64, tpu.core_type = #tpu.core_type<tc>} {
    %c0 = arith.constant 0 : index
    %c0_0 = arith.constant 0 : index
    %0 = vector.load %arg0[%c0, %c0_0] : memref<16x128xbf16, #tpu.memory_space<vmem>>, vector<16x128xbf16>
    %c0_1 = arith.constant 0 : index
    %c0_2 = arith.constant 0 : index
    %1 = vector.load %arg1[%c0_1, %c0_2] : memref<128x128xbf16, #tpu.memory_space<vmem>>, vector<128x128xbf16>
    %cst = arith.constant dense<0.000000e+00> : vector<16x128xf32>
    %2 = tpu.matmul %0, %1, %cst {dimension_numbers = #tpu.dot_dimension_numbers<[1], [0], [0], [1], [0, 0, 1, 1], [], []>} : vector<16x128xbf16>, vector<128x128xbf16>, vector<16x128xf32> -> vector<16x128xf32>
    %3 = vector.shape_cast %2 : vector<16x128xf32> to vector<2x8x128xf32>
    %c0_3 = arith.constant 0 : index
    %c0_4 = arith.constant 0 : index
    %4 = vector.load %arg2[%c0_3, %c0_4] : memref<8x128xf32, #tpu.memory_space<vmem>>, vector<8x128xf32>
    %5 = vector.shape_cast %4 : vector<8x128xf32> to vector<1x8x128xf32>
    %6 = vector.broadcast %5 : vector<1x8x128xf32> to vector<2x8x128xf32>
    %7 = arith.addf %3, %6 : vector<2x8x128xf32>
    %cst_5 = arith.constant 0.000000e+00 : f32
    %8 = vector.broadcast %cst_5 : f32 to vector<2x8x128xf32>
    %9 = arith.maximumf %7, %8 : vector<2x8x128xf32>
    %cst_6 = arith.constant dense<0xFF800000> : vector<2x128xf32>
    %10 = vector.multi_reduction <maximumf>, %9, %cst_6 [1] : vector<2x8x128xf32> to vector<2x128xf32>
    %11 = arith.truncf %10 : vector<2x128xf32> to vector<2x128xbf16>
    %c0_7 = arith.constant 0 : index
    %c0_8 = arith.constant 0 : index
    %12 = vector.load %arg3[%c0_7, %c0_8] : memref<128x128xbf16, #tpu.memory_space<vmem>>, vector<128x128xbf16>
    %cst_9 = arith.constant dense<0.000000e+00> : vector<2x128xf32>
    %13 = tpu.matmul %11, %12, %cst_9 {dimension_numbers = #tpu.dot_dimension_numbers<[1], [0], [0], [1], [0, 0, 1, 1], [], []>} : vector<2x128xbf16>, vector<128x128xbf16>, vector<2x128xf32> -> vector<2x128xf32>
    %c0_10 = arith.constant 0 : index
    %c0_11 = arith.constant 0 : index
    %14 = vector.load %arg4[%c0_10, %c0_11] : memref<1x128xf32, #tpu.memory_space<vmem>>, vector<1x128xf32>
    %15 = vector.broadcast %14 : vector<1x128xf32> to vector<2x128xf32>
    %16 = arith.addf %13, %15 : vector<2x128xf32>
    %c0_12 = arith.constant 0 : index
    %c0_13 = arith.constant 0 : index
    %17 = vector.load %arg5[%c0_12, %c0_13] : memref<2x128xf32, #tpu.memory_space<vmem>>, vector<2x128xf32>
    tpu.vector_store %arg5[%c0_12, %c0_13], %16 {strides = array<i32>} : memref<2x128xf32, #tpu.memory_space<vmem>>, vector<2x128xf32>,
    %c0_14 = arith.constant 0 : index
    %c0_15 = arith.constant 0 : index
    %18 = vector.load %arg6[%c0_14, %c0_15] : memref<2x128xf32, #tpu.memory_space<vmem>>, vector<2x128xf32>
    tpu.vector_store %arg6[%c0_14, %c0_15], %10 {strides = array<i32>} : memref<2x128xf32, #tpu.memory_space<vmem>>, vector<2x128xf32>,
    return
  }
}

</mosaic_0001>

<llo_original>
// kernel: forward.1
$region0: #{forward.1}
  #allocation0 [shape = 'u32[]', space=smem, size = 0x4, offset = 0x4, fixed_abs, tag = 'smem constant byte address 0x4 - core index']
  #allocation1 [shape = 'u32[144,128]{1,0:T(1,128)}', space=vmem, size = 0x12000, scoped, tag = 'internal scratch']
  %s0 = inlined_call_operand.vmem [shape: bf16[16,128], index: 0, kind: input, shape index: {}]
  %s1 = inlined_call_operand.vmem [shape: bf16[128,128], index: 1, kind: input, shape index: {}]
  %s2 = inlined_call_operand.vmem [shape: f32[8,128], index: 2, kind: input, shape index: {}]
  %s3 = inlined_call_operand.vmem [shape: bf16[128,128], index: 3, kind: input, shape index: {}]
  %s4 = inlined_call_operand.vmem [shape: f32[1,128], index: 4, kind: input, shape index: {}]
  %s5 = inlined_call_operand.hbm [shape: f32[2,128], index: 5, kind: output, shape index: {0}]
  %s6 = inlined_call_operand.hbm [shape: f32[2,128], index: 6, kind: output, shape index: {1}]
  %7 = xla_tuple %s5, %s6
  %s8 = sld [smem:[#allocation0]]
  $region38: #{forward.1} parent=0
    _
  %s10 = ssub.s32 1, %s8
  %s11 = scalar_select 0, %s10, %s8
  $region1: #{forward.1} parent=0
    #allocation2 [shape = 'u8[1024]{0}', space=vmem, size = 0x400, scoped, tag = 'output window, operand 0, single buffered']
    #allocation3 [shape = 's32[1]{0}', space=sflag, size = 0x4, scoped, tag = 'scoped memory for forward.1']
    #allocation4 [shape = 'u8[1024]{0}', space=vmem, size = 0x400, scoped, tag = 'output window, operand 1, single buffered']
    #allocation5 [shape = 's32[1]{0}', space=sflag, size = 0x4, scoped, tag = 'scoped memory for forward.1']
    %12 = vsyncpa [#allocation3], 0
    %13 = vsyncpa [#allocation5], 0
    // Predicated region
    $region2: #{forward.1} parent=1 // pred_check
      _
    $region3: #{forward.1} parent=1 // pred_check_branch
      %15 = sbr.rel (0) target = $region5
    $region4: #{forward.1} parent=1 // pred_region
      _
    $region5: #{forward.1} parent=1 // pred_fallthru
      _
    // Predicated region
    $region6: #{forward.1} parent=1 // pred_check
      _
    $region7: #{forward.1} parent=1 // pred_check_branch
      %17 = sbr.rel (0) target = $region9
    $region8: #{forward.1} parent=1 // pred_region
      _
    $region9: #{forward.1} parent=1 // pred_fallthru
      _
    // Predicated region
    $region10: #{forward.1} parent=1 // pred_check
      _
    $region11: #{forward.1} parent=1 // pred_check_branch
      %19 = sbr.rel (0) target = $region13
    $region12: #{forward.1} parent=1 // pred_region
      _
    $region13: #{forward.1} parent=1 // pred_fallthru
      _
    // Predicated region
    $region14: #{forward.1} parent=1 // pred_check
      _
    $region15: #{forward.1} parent=1 // pred_check_branch
      %21 = sbr.rel (0) target = $region17
    $region16: #{forward.1} parent=1 // pred_region
      _
    $region17: #{forward.1} parent=1 // pred_fallthru
      _
    // Predicated region
    $region18: #{forward.1} parent=1 // pred_check
      _
    $region19: #{forward.1} parent=1 // pred_check_branch
      %23 = sbr.rel (0) target = $region21
    $region20: #{forward.1} parent=1 // pred_region
      _
    $region21: #{forward.1} parent=1 // pred_fallthru
      _
    %v25 = vld [vmem:[%s0] sm:$0xf]
    %v26 = vld [vmem:[%s0 + $0x4] sm:$0xf]
    %v27 = vld [vmem:[%s1] sm:$0xf]
    %v28 = vld [vmem:[%s1 + $0x4] sm:$0xf]
    %v29 = vld [vmem:[%s1 + $0x8] sm:$0xf]
    %v30 = vld [vmem:[%s1 + $0xc] sm:$0xf]
    %v31 = vld [vmem:[%s1 + $0x10] sm:$0xf]
    %v32 = vld [vmem:[%s1 + $0x14] sm:$0xf]
    %v33 = vld [vmem:[%s1 + $0x18] sm:$0xf]
    %v34 = vld [vmem:[%s1 + $0x1c] sm:$0xf]
    %v35 = vld [vmem:[%s1 + $0x20] sm:$0xf]
    %v36 = vld [vmem:[%s1 + $0x24] sm:$0xf]
    %v37 = vld [vmem:[%s1 + $0x28] sm:$0xf]
    %v38 = vld [vmem:[%s1 + $0x2c] sm:$0xf]
    %v39 = vld [vmem:[%s1 + $0x30] sm:$0xf]
    %v40 = vld [vmem:[%s1 + $0x34] sm:$0xf]
    %v41 = vld [vmem:[%s1 + $0x38] sm:$0xf]
    %v42 = vld [vmem:[%s1 + $0x3c] sm:$0xf]
    %v45 = vunpack.c.l.b16 %v25
    %v46 = vunpack.c.l.b16 %v26
    %v47 = vpack.c.b16 %v46, %v45
    %v65 = vunpack.c.l.b16 %v27
    %v66 = vunpack.c.l.b16 %v28
    %v67 = vunpack.c.l.b16 %v29
    %v68 = vunpack.c.l.b16 %v30
    %v69 = vunpack.c.l.b16 %v31
    %v70 = vunpack.c.l.b16 %v32
    %v71 = vunpack.c.l.b16 %v33
    %v72 = vunpack.c.l.b16 %v34
    %v73 = vunpack.c.l.b16 %v35
    %v74 = vunpack.c.l.b16 %v36
    %v75 = vunpack.c.l.b16 %v37
    %v76 = vunpack.c.l.b16 %v38
    %v77 = vunpack.c.l.b16 %v39
    %v78 = vunpack.c.l.b16 %v40
    %v79 = vunpack.c.l.b16 %v41
    %v80 = vunpack.c.l.b16 %v42
    %v81 = vpack.c.b16 %v66, %v65
    %v82 = vpack.c.b16 %v68, %v67
    %v83 = vpack.c.b16 %v70, %v69
    %v84 = vpack.c.b16 %v72, %v71
    %v85 = vpack.c.b16 %v74, %v73
    %v86 = vpack.c.b16 %v76, %v75
    %v87 = vpack.c.b16 %v78, %v77
    %v88 = vpack.c.b16 %v80, %v79
    %97 = vmatprep.subr.bf16.mxu0 0
    %98 = vmatpush1.bf16.msra.mxu0 %v81
    %99 = vmatprep.subr.bf16.mxu0 0
    %100 = vmatpush1.bf16.msra.mxu0 %v82
    %101 = vmatprep.subr.bf16.mxu0 0
    %102 = vmatpush1.bf16.msra.mxu0 %v83
    %103 = vmatprep.subr.bf16.mxu0 0
    %104 = vmatpush1.bf16.msra.mxu0 %v84
    %105 = vmatprep.subr.bf16.mxu0 0
    %106 = vmatpush1.bf16.msra.mxu0 %v85
    %107 = vmatprep.subr.bf16.mxu0 0
    %108 = vmatpush1.bf16.msra.mxu0 %v86
    %109 = vmatprep.subr.bf16.mxu0 0
    %110 = vmatpush1.bf16.msra.mxu0 %v87
    %111 = vmatprep.subr.bf16.mxu0 0
    %112 = vmatpush1.bf16.msra.mxu0 %v88
    %113 = vmatprep.subr.bf16.mxu0 0
    %114 = vmatpush1.bf16.msra.mxu0 0
    %115 = vmatprep.subr.bf16.mxu0 0
    %116 = vmatpush1.bf16.msra.mxu0 0
    %117 = vmatprep.subr.bf16.mxu0 0
    %118 = vmatpush1.bf16.msra.mxu0 0
    %119 = vmatprep.subr.bf16.mxu0 0
    %120 = vmatpush1.bf16.msra.mxu0 0
    %121 = vmatprep.subr.bf16.mxu0 0
    %122 = vmatpush1.bf16.msra.mxu0 0
    %123 = vmatprep.subr.bf16.mxu0 0
    %124 = vmatpush1.bf16.msra.mxu0 0
    %125 = vmatprep.subr.bf16.mxu0 0
    %126 = vmatpush1.bf16.msra.mxu0 0
    %127 = vmatprep.subr.bf16.mxu0 0
    %128 = vmatpush1.bf16.msra.mxu0 0
    %129 = vmatprep.mubr.bf16.mxu0 0
    %130 = vmatmul.mubr.bf16.gmra.mrb[0].mxu0 %v47
    %v131 = vpop.f32.mrb[0].mxu0
    %v132 = vadd.f32 0.0, %v131
    %v133 = vpop.f32.mrb[0].mxu0
    %v134 = vpop.f32.mrb[0].mxu0
    %v135 = vadd.f32 0.0, %v134
    %v136 = vpop.f32.mrb[0].mxu0
    %137 = vdwg.mxu0
    %v138 = vld [vmem:[%s2] sm:$0xff]
    %v139 = vadd.f32 %v132, %v138
    %v140 = vadd.f32 %v135, %v138
    %v141 = vmax.f32 %v139, 0.0
    %v142 = vmax.f32 %v140, 0.0
    %v143 = vrot.slane %v141, 4
    %v144 = vmax.f32 %v141, %v143
    %v145 = vrot.slane %v144, 2
    %v146 = vmax.f32 %v144, %v145
    %v147 = vrot.slane %v146, 1
    %v148 = vmax.f32 %v146, %v147
    %v149 = vrot.slane %v142, 4
    %v150 = vmax.f32 %v142, %v149
    %v151 = vrot.slane %v150, 2
    %v152 = vmax.f32 %v150, %v151
    %v153 = vrot.slane %v152, 1
    %v154 = vmax.f32 %v152, %v153
    %v155 = vpack.c.bf16 %v148, %v148
    %v156 = vpack.c.bf16 %v154, %v154
    %v157 = vld [vmem:[%s3] sm:$0xf]
    %v158 = vld [vmem:[%s3 + $0x4] sm:$0xf]
    %v159 = vld [vmem:[%s3 + $0x8] sm:$0xf]
    %v160 = vld [vmem:[%s3 + $0xc] sm:$0xf]
    %v161 = vld [vmem:[%s3 + $0x10] sm:$0xf]
    %v162 = vld [vmem:[%s3 + $0x14] sm:$0xf]
    %v163 = vld [vmem:[%s3 + $0x18] sm:$0xf]
    %v164 = vld [vmem:[%s3 + $0x1c] sm:$0xf]
    %v165 = vld [vmem:[%s3 + $0x20] sm:$0xf]
    %v166 = vld [vmem:[%s3 + $0x24] sm:$0xf]
    %v167 = vld [vmem:[%s3 + $0x28] sm:$0xf]
    %v168 = vld [vmem:[%s3 + $0x2c] sm:$0xf]
    %v169 = vld [vmem:[%s3 + $0x30] sm:$0xf]
    %v170 = vld [vmem:[%s3 + $0x34] sm:$0xf]
    %v171 = vld [vmem:[%s3 + $0x38] sm:$0xf]
    %v172 = vld [vmem:[%s3 + $0x3c] sm:$0xf]
    %v173 = vld [vmem:[%s4] sm:$0x1]
    %v175 = vlaneseq
    %v176 = vshrl.u32 %v175, 7
    %v177 = vsub.s32 0, %v176
    %v178 = vrot.slane %v173, %v177
    %v182 = vunpack.c.l.b16 %v155
    %v183 = vunpack.c.l.b16 %v156
    %vm184 = vcmask 1041409
    %v185 = vsel %vm184, %v183, %v182
    %v186 = vpack.c.b16 %v185, %v185
    %v204 = vunpack.c.l.b16 %v157
    %v205 = vunpack.c.l.b16 %v158
    %v206 = vunpack.c.l.b16 %v159
    %v207 = vunpack.c.l.b16 %v160
    %v208 = vunpack.c.l.b16 %v161
    %v209 = vunpack.c.l.b16 %v162
    %v210 = vunpack.c.l.b16 %v163
    %v211 = vunpack.c.l.b16 %v164
    %v212 = vunpack.c.l.b16 %v165
    %v213 = vunpack.c.l.b16 %v166
    %v214 = vunpack.c.l.b16 %v167
    %v215 = vunpack.c.l.b16 %v168
    %v216 = vunpack.c.l.b16 %v169
    %v217 = vunpack.c.l.b16 %v170
    %v218 = vunpack.c.l.b16 %v171
    %v219 = vunpack.c.l.b16 %v172
    %v220 = vpack.c.b16 %v205, %v204
    %v221 = vpack.c.b16 %v207, %v206
    %v222 = vpack.c.b16 %v209, %v208
    %v223 = vpack.c.b16 %v211, %v210
    %v224 = vpack.c.b16 %v213, %v212
    %v225 = vpack.c.b16 %v215, %v214
    %v226 = vpack.c.b16 %v217, %v216
    %v227 = vpack.c.b16 %v219, %v218
    %236 = vmatprep.subr.bf16.mxu0 0
    %237 = vmatpush1.bf16.msra.mxu0 %v220
    %238 = vmatprep.subr.bf16.mxu0 0
    %239 = vmatpush1.bf16.msra.mxu0 %v221
    %240 = vmatprep.subr.bf16.mxu0 0
    %241 = vmatpush1.bf16.msra.mxu0 %v222
    %242 = vmatprep.subr.bf16.mxu0 0
    %243 = vmatpush1.bf16.msra.mxu0 %v223
    %244 = vmatprep.subr.bf16.mxu0 0
    %245 = vmatpush1.bf16.msra.mxu0 %v224
    %246 = vmatprep.subr.bf16.mxu0 0
    %247 = vmatpush1.bf16.msra.mxu0 %v225
    %248 = vmatprep.subr.bf16.mxu0 0
    %249 = vmatpush1.bf16.msra.mxu0 %v226
    %250 = vmatprep.subr.bf16.mxu0 0
    %251 = vmatpush1.bf16.msra.mxu0 %v227
    %252 = vmatprep.subr.bf16.mxu0 0
    %253 = vmatpush1.bf16.msra.mxu0 0
    %254 = vmatprep.subr.bf16.mxu0 0
    %255 = vmatpush1.bf16.msra.mxu0 0
    %256 = vmatprep.subr.bf16.mxu0 0
    %257 = vmatpush1.bf16.msra.mxu0 0
    %258 = vmatprep.subr.bf16.mxu0 0
    %259 = vmatpush1.bf16.msra.mxu0 0
    %260 = vmatprep.subr.bf16.mxu0 0
    %261 = vmatpush1.bf16.msra.mxu0 0
    %262 = vmatprep.subr.bf16.mxu0 0
    %263 = vmatpush1.bf16.msra.mxu0 0
    %264 = vmatprep.subr.bf16.mxu0 0
    %265 = vmatpush1.bf16.msra.mxu0 0
    %266 = vmatprep.subr.bf16.mxu0 0
    %267 = vmatpush1.bf16.msra.mxu0 0
    %268 = vmatprep.mubr.bf16.mxu0 0
    %269 = vmatmul.mubr.bf16.gmra.mrb[0].mxu0 %v186
    %v270 = vpop.f32.mrb[0].mxu0
    %v271 = vadd.f32 %v178, %v270
    %v272 = vpop.f32.mrb[0].mxu0
    %v273 = vpop.f32.mrb[0].mxu0
    %v274 = vpop.f32.mrb[0].mxu0
    %275 = vdwg.mxu0
    %276 = vst [vmem:[#allocation2] sm:$0x3] %v271
    %v279 = vsel %vm184, %v154, %v148
    %281 = vst [vmem:[#allocation4] sm:$0x3] %v279
    // Predicated region
    $region22: #{forward.1} parent=1 // pred_check
      _
    $region23: #{forward.1} parent=1 // pred_check_branch
      %283 = sbr.rel (0) target = $region25
    $region24: #{forward.1} parent=1 // pred_region
      %s285 = ssub.s32 32, 32
      %286 = vsyncadd [#allocation3], %s285
      %s288 = sshll.u32 [#allocation2], 4
      %s289 = int_to_ptr.vmem [resolvable:$true] %s288
      %291 = dma.vmem_to_hbm [thread:$0]  %s289, 32, %s5, [#allocation3]
    $region25: #{forward.1} parent=1 // pred_fallthru
      _
    // Predicated region
    $region26: #{forward.1} parent=1 // pred_check
      _
    $region27: #{forward.1} parent=1 // pred_check_branch
      %293 = sbr.rel (0) target = $region29
    $region28: #{forward.1} parent=1 // pred_region
      %s295 = ssub.s32 32, 32
      %296 = vsyncadd [#allocation5], %s295
      %s298 = sshll.u32 [#allocation4], 4
      %s299 = int_to_ptr.vmem [resolvable:$true] %s298
      %301 = dma.vmem_to_hbm [thread:$0]  %s299, 32, %s6, [#allocation5]
    $region29: #{forward.1} parent=1 // pred_fallthru
      _
    // Predicated region
    $region30: #{forward.1} parent=1 // pred_check
      _
    $region31: #{forward.1} parent=1 // pred_check_branch
      %303 = sbr.rel (0) target = $region33
    $region32: #{forward.1} parent=1 // pred_region
      %304 = dma.done [#allocation3], 32
    $region33: #{forward.1} parent=1 // pred_fallthru
      _
    // Predicated region
    $region34: #{forward.1} parent=1 // pred_check
      _
    $region35: #{forward.1} parent=1 // pred_check_branch
      %306 = sbr.rel (0) target = $region37
    $region36: #{forward.1} parent=1 // pred_region
      %307 = dma.done [#allocation5], 32
    $region37: #{forward.1} parent=1 // pred_fallthru
      _
    %308 = vsyncpa [#allocation3], 1
    %309 = vsyncpa [#allocation5], 1

</llo_original>
